<compile_context>
chip_gen: v7x
topology: tpu7x:2x2x1
jax: 0.10.0
libtpu: 0.0.40
codegen_flags: <defaults>
</compile_context>

<pallas_src>
import jax
import jax.numpy as jnp
from jax import lax
from jax.experimental import pallas as pl
from jax.experimental.pallas import tpu as pltpu


WEIGHT_LOSSES = 0.025
MINIMUM = 0.0
_MAXIMUM = {"clapirn": 211473.0, "niftyreg": 194404.0}

_LANES = 128             # lane-dense last dim of every streamed slab
_MAX_BLOCK_ROWS = 2048   # (2048, 128) f32 block = 1 MiB per stream per buffer


def _sublane_align(dtype):
    """Sublane multiple required by the packed layout of `dtype` (8/16/32)."""
    return max(8, 32 // jnp.dtype(dtype).itemsize)


def _to_slab(x):
    """Flatten to a lane-dense (rows, 128) slab.

    Zero-copy (pure reshape) whenever x.size is a multiple of 128; otherwise
    only the <128-element ragged tail forces a pad copy.
    # TODO(synk): fully zero-copy tail handling would need a manual-DMA
    # (memory_space=pl.ANY) path; not worth it for this loss kernel.
    """
    flat = x.reshape(-1)
    n = int(flat.shape[0])
    rows = -(-n // _LANES)
    padded = rows * _LANES
    if padded != n:
        flat = jnp.pad(flat, (0, padded - n))
    return flat.reshape(rows, _LANES), n, rows


def _make_loss_kernel(*, block_rows, nb_inner, minimum, inv_scale,
                      n_dice, n_jac, covered_elems):
    """Streaming sum-of-squared-errors kernel; all scalars are baked constants."""
    block_elems = block_rows * _LANES
    mask_dice = n_dice != covered_elems
    mask_jac = n_jac != covered_elems

    def kernel(pd_ref, td_ref, pj_ref, tj_ref, out_ref, dice_acc, jac_acc):
        core = pl.program_id(0)
        step = pl.program_id(1)

        @pl.when(step == 0)
        def _init():
            dice_acc[...] = jnp.zeros_like(dice_acc)
            jac_acc[...] = jnp.zeros_like(jac_acc)

        # Stream in native dtype; upcast in-kernel (hidden under HBM traffic).
        pd = pd_ref[...].astype(jnp.float32)
        td = td_ref[...].astype(jnp.float32)
        pj = pj_ref[...].astype(jnp.float32)
        tj = tj_ref[...].astype(jnp.float32)
        if minimum != 0.0:               # trace-time: skipped since minimum == 0
            tj = tj - minimum
        tj = tj * inv_scale              # reciprocal precomputed at trace time

        dd = pd - td
        dj = pj - tj
        dd2 = dd * dd
        dj2 = dj * dj

        if mask_dice or mask_jac:
            # Logical (unclamped) element index of every slot in this block;
            # out-of-range / padded / stale-partial-block slots contribute 0.
            start = (core * nb_inner + step) * block_elems
            rows_i = lax.broadcasted_iota(jnp.int32, (block_rows, _LANES), 0)
            lanes_i = lax.broadcasted_iota(jnp.int32, (block_rows, _LANES), 1)
            elem = start + rows_i * _LANES + lanes_i
            if mask_dice:
                dd2 = jnp.where(elem < n_dice, dd2, 0.0)
            if mask_jac:
                dj2 = jnp.where(elem < n_jac, dj2, 0.0)

        # Fold the block into one-vreg accumulators (no full-block acc ld/st).
        dice_acc[...] += jnp.sum(dd2.reshape(block_rows // 8, 8, _LANES), axis=0)
        jac_acc[...] += jnp.sum(dj2.reshape(block_rows // 8, 8, _LANES), axis=0)

        @pl.when(step == pl.num_programs(1) - 1)
        def _finalize():
            dice_sse = jnp.sum(dice_acc[...])
            jac_sse = jnp.sum(jac_acc[...])
            rows_i = lax.broadcasted_iota(jnp.int32, (8, _LANES), 0)
            lanes_i = lax.broadcasted_iota(jnp.int32, (8, _LANES), 1)
            first = rows_i == 0
            out_ref[...] = (jnp.where(first & (lanes_i == 0), dice_sse, 0.0)
                            + jnp.where(first & (lanes_i == 1), jac_sse, 0.0))

    return kernel


def compute_loss(predicted_dice, target_dice, predicted_jac, target_jac,
                 registration_model):
    """Returns (total_loss, dice_loss, jac_loss) as f32 scalars."""
    if registration_model not in _MAXIMUM:
        raise ValueError(f"unknown registration_model: {registration_model}")
    maximum = _MAXIMUM[registration_model]
    if maximum == MINIMUM:
        raise ValueError("maximum == minimum: normalization would divide by zero")
    inv_scale = 1.0 / (maximum - MINIMUM)

    pd, n_dice, rows_dice = _to_slab(predicted_dice)
    td, n_td, _ = _to_slab(target_dice)
    pj, n_jac, rows_jac = _to_slab(predicted_jac)
    tj, n_tj, _ = _to_slab(target_jac)
    if n_td != n_dice or n_tj != n_jac:
        raise ValueError("predicted/target element counts must match")
    if n_dice == 0 or n_jac == 0:
        raise ValueError("empty inputs")

    # Shared tiling: block rows sized for ~1 MiB/stream blocks, rounded to the
    # strictest sublane packing among the four input dtypes (8 f32 / 16 bf16).
    align = max(_sublane_align(x.dtype) for x in (pd, td, pj, tj))
    rows_max = max(rows_dice, rows_jac)
    block_rows = min(_MAX_BLOCK_ROWS, -(-rows_max // align) * align)
    nb_total = -(-rows_max // block_rows)

    # v7x: split the streaming reduction across both TensorCores via a leading
    # "parallel" axis. Sequential (and harmless) on single-core v5e/v6e.
    n_cores = 2 if nb_total >= 2 else 1
    nb_inner = -(-nb_total // n_cores)
    covered_elems = n_cores * nb_inner * block_rows * _LANES

    nb_dice = -(-rows_dice // block_rows)
    nb_jac = -(-rows_jac // block_rows)

    def make_index_map(nb_stream):
        if n_cores * nb_inner > nb_stream:
            last = nb_stream - 1
            return lambda c, i: (jnp.minimum(c * nb_inner + i, last), 0)
        return lambda c, i: (c * nb_inner + i, 0)

    dice_spec = pl.BlockSpec((block_rows, _LANES), make_index_map(nb_dice))
    jac_spec = pl.BlockSpec((block_rows, _LANES), make_index_map(nb_jac))

    kernel = _make_loss_kernel(
        block_rows=block_rows, nb_inner=nb_inner, minimum=MINIMUM,
        inv_scale=inv_scale, n_dice=n_dice, n_jac=n_jac,
        covered_elems=covered_elems)

    in_bytes = sum(int(x.size) * x.dtype.itemsize for x in (pd, td, pj, tj))
    cost = pl.CostEstimate(flops=3 * n_dice + 5 * n_jac, transcendentals=0,
                           bytes_accessed=in_bytes + n_cores * 8 * _LANES * 4)

    out = pl.pallas_call(
        kernel,
        out_shape=jax.ShapeDtypeStruct((n_cores * 8, _LANES), jnp.float32),
        grid_spec=pltpu.PrefetchScalarGridSpec(
            num_scalar_prefetch=0,
            grid=(n_cores, nb_inner),
            in_specs=[dice_spec, dice_spec, jac_spec, jac_spec],
            out_specs=pl.BlockSpec((8, _LANES), lambda c, i: (c, 0)),
            scratch_shapes=[pltpu.VMEM((8, _LANES), jnp.float32),
                            pltpu.VMEM((8, _LANES), jnp.float32)],
        ),
        compiler_params=pltpu.CompilerParams(
            dimension_semantics=("parallel", "arbitrary"),
            vmem_limit_bytes=32 * 1024 * 1024),
        cost_estimate=cost,
    )(pd, td, pj, tj)

    # Combine the per-core SSE partials and apply 1/N scaling + loss weighting.
    dice_loss = jnp.sum(out[:, 0]) * (1.0 / n_dice)
    jac_loss = jnp.sum(out[:, 1]) * (1.0 / n_jac)
    total_loss = dice_loss + WEIGHT_LOSSES * jac_loss
    return total_loss, dice_loss, jac_loss


def _reference(pd, td, pj, tj, maximum):
    pd, td, pj, tj = (x.astype(jnp.float32) for x in (pd, td, pj, tj))
    tjn = (tj - MINIMUM) / (maximum - MINIMUM)
    dice = jnp.mean((pd - td) ** 2)
    jac = jnp.mean((pj - tjn) ** 2)
    return dice + WEIGHT_LOSSES * jac, dice, jac


def _check(name, got, want, rtol, atol=1e-6):
    for g, w in zip(got, want):
        if not jnp.allclose(g, w, rtol=rtol, atol=atol):
            raise AssertionError(f"{name}: got {g} expected {w}")


if __name__ == "__main__":
    keys = jax.random.split(jax.random.PRNGKey(0), 12)

    # --- Test 1: tile-aligned f32 inputs, single block, single core ----------
    B, F = 8, 128
    pd = jax.random.uniform(keys[0], (B, F), dtype=jnp.float32)
    td = jax.random.uniform(keys[1], (B, F), dtype=jnp.float32)
    pj = jax.random.uniform(keys[2], (B, F), dtype=jnp.float32)
    tj = jax.random.uniform(keys[3], (B, F), dtype=jnp.float32) * _MAXIMUM["clapirn"]
    got = compute_loss(pd, td, pj, tj, "clapirn")
    jax.block_until_ready(got)
    _check("test1", got, _reference(pd, td, pj, tj, _MAXIMUM["clapirn"]), rtol=1e-5)

    # --- Test 2: ragged bf16 inputs (tail pad + in-kernel mask + upcast) -----
    B2, F2 = 5, 37
    pd2 = jax.random.uniform(keys[4], (B2, F2), dtype=jnp.float32).astype(jnp.bfloat16)
    td2 = jax.random.uniform(keys[5], (B2, F2), dtype=jnp.float32).astype(jnp.bfloat16)
    pj2 = jax.random.uniform(keys[6], (B2, F2), dtype=jnp.float32).astype(jnp.bfloat16)
    tj2 = (jax.random.uniform(keys[7], (B2, F2), dtype=jnp.float32)
           * _MAXIMUM["niftyreg"]).astype(jnp.bfloat16)
    got2 = compute_loss(pd2, td2, pj2, tj2, "niftyreg")
    jax.block_until_ready(got2)
    _check("test2", got2, _reference(pd2, td2, pj2, tj2, _MAXIMUM["niftyreg"]),
           rtol=1e-5)

    # --- Test 3: multi-block two-core grid, unequal stream sizes, clamping ---
    pd3 = jax.random.uniform(keys[8], (6, 50), dtype=jnp.float32)
    td3 = jax.random.uniform(keys[9], (6, 50), dtype=jnp.float32)
    pj3 = jax.random.uniform(keys[10], (1032, 1024), dtype=jnp.float32)
    tj3 = jax.random.uniform(keys[11], (1032, 1024), dtype=jnp.float32) * _MAXIMUM["clapirn"]
    got3 = compute_loss(pd3, td3, pj3, tj3, "clapirn")
    jax.block_until_ready(got3)
    _check("test3", got3, _reference(pd3, td3, pj3, tj3, _MAXIMUM["clapirn"]),
           rtol=1e-4)

    print("KERNEL_OK")
</pallas_src>

<mosaic_0001>
module attributes {stable_mosaic.version = 11 : i64} {
  func.func @kernel(%arg0: i32, %arg1: i32, %arg2: memref<8x128xf32, #tpu.memory_space<vmem>>, %arg3: memref<8x128xf32, #tpu.memory_space<vmem>>, %arg4: memref<8x128xf32, #tpu.memory_space<vmem>>, %arg5: memref<8x128xf32, #tpu.memory_space<vmem>>, %arg6: memref<8x128xf32, #tpu.memory_space<vmem>>, %arg7: memref<8x128xf32, #tpu.memory_space<vmem>>, %arg8: memref<8x128xf32, #tpu.memory_space<vmem>>) attributes {dimension_semantics = [#tpu.dimension_semantics<parallel>, #tpu.dimension_semantics<arbitrary>], iteration_bounds = array<i64: 1, 1>, scalar_prefetch = 0 : i64, scratch_operands = 2 : i64, tpu.core_type = #tpu.core_type<tc>, window_params = [{transform_indices = @transform_0, window_bounds = array<i64: 8, 128>}, {transform_indices = @transform_1, window_bounds = array<i64: 8, 128>}, {transform_indices = @transform_2, window_bounds = array<i64: 8, 128>}, {transform_indices = @transform_3, window_bounds = array<i64: 8, 128>}, {transform_indices = @transform_4, window_bounds = array<i64: 8, 128>}]} {
    %c0_i32 = arith.constant 0 : i32
    %0 = arith.cmpi eq, %arg1, %c0_i32 : i32
    %1 = arith.extui %0 : i1 to i32
    %c0_i32_0 = arith.constant 0 : i32
    %2 = arith.cmpi ne, %1, %c0_i32_0 : i32
    scf.if %2 {
      %cst_20 = arith.constant 0.000000e+00 : f32
      %26 = vector.broadcast %cst_20 : f32 to vector<8x128xf32>
      %c0_21 = arith.constant 0 : index
      %c0_22 = arith.constant 0 : index
      %27 = vector.load %arg7[%c0_21, %c0_22] : memref<8x128xf32, #tpu.memory_space<vmem>>, vector<8x128xf32>
      tpu.vector_store %arg7[%c0_21, %c0_22], %26 {strides = array<i32>} : memref<8x128xf32, #tpu.memory_space<vmem>>, vector<8x128xf32>,
      %cst_23 = arith.constant 0.000000e+00 : f32
      %28 = vector.broadcast %cst_23 : f32 to vector<8x128xf32>
      %c0_24 = arith.constant 0 : index
      %c0_25 = arith.constant 0 : index
      %29 = vector.load %arg8[%c0_24, %c0_25] : memref<8x128xf32, #tpu.memory_space<vmem>>, vector<8x128xf32>
      tpu.vector_store %arg8[%c0_24, %c0_25], %28 {strides = array<i32>} : memref<8x128xf32, #tpu.memory_space<vmem>>, vector<8x128xf32>,
    } else {
    }
    %c0 = arith.constant 0 : index
    %c0_1 = arith.constant 0 : index
    %3 = vector.load %arg2[%c0, %c0_1] : memref<8x128xf32, #tpu.memory_space<vmem>>, vector<8x128xf32>
    %c0_2 = arith.constant 0 : index
    %c0_3 = arith.constant 0 : index
    %4 = vector.load %arg3[%c0_2, %c0_3] : memref<8x128xf32, #tpu.memory_space<vmem>>, vector<8x128xf32>
    %c0_4 = arith.constant 0 : index
    %c0_5 = arith.constant 0 : index
    %5 = vector.load %arg4[%c0_4, %c0_5] : memref<8x128xf32, #tpu.memory_space<vmem>>, vector<8x128xf32>
    %c0_6 = arith.constant 0 : index
    %c0_7 = arith.constant 0 : index
    %6 = vector.load %arg5[%c0_6, %c0_7] : memref<8x128xf32, #tpu.memory_space<vmem>>, vector<8x128xf32>
    %cst = arith.constant 4.72873626E-6 : f32
    %7 = vector.broadcast %cst : f32 to vector<8x128xf32>
    %8 = arith.mulf %6, %7 : vector<8x128xf32>
    %9 = arith.subf %3, %4 : vector<8x128xf32>
    %10 = arith.subf %5, %8 : vector<8x128xf32>
    %11 = arith.mulf %9, %9 : vector<8x128xf32>
    %12 = arith.mulf %10, %10 : vector<8x128xf32>
    %c0_8 = arith.constant 0 : index
    %c0_9 = arith.constant 0 : index
    %13 = vector.load %arg7[%c0_8, %c0_9] : memref<8x128xf32, #tpu.memory_space<vmem>>, vector<8x128xf32>
    %14 = vector.shape_cast %11 : vector<8x128xf32> to vector<1x8x128xf32>
    %cst_10 = arith.constant dense<0.000000e+00> : vector<8x128xf32>
    %15 = vector.multi_reduction <add>, %14, %cst_10 [0] : vector<1x8x128xf32> to vector<8x128xf32>
    %16 = arith.addf %13, %15 : vector<8x128xf32>
    %c0_11 = arith.constant 0 : index
    %c0_12 = arith.constant 0 : index
    %17 = vector.load %arg7[%c0_11, %c0_12] : memref<8x128xf32, #tpu.memory_space<vmem>>, vector<8x128xf32>
    tpu.vector_store %arg7[%c0_11, %c0_12], %16 {strides = array<i32>} : memref<8x128xf32, #tpu.memory_space<vmem>>, vector<8x128xf32>,
    %c0_13 = arith.constant 0 : index
    %c0_14 = arith.constant 0 : index
    %18 = vector.load %arg8[%c0_13, %c0_14] : memref<8x128xf32, #tpu.memory_space<vmem>>, vector<8x128xf32>
    %19 = vector.shape_cast %12 : vector<8x128xf32> to vector<1x8x128xf32>
    %cst_15 = arith.constant dense<0.000000e+00> : vector<8x128xf32>
    %20 = vector.multi_reduction <add>, %19, %cst_15 [0] : vector<1x8x128xf32> to vector<8x128xf32>
    %21 = arith.addf %18, %20 : vector<8x128xf32>
    %c0_16 = arith.constant 0 : index
    %c0_17 = arith.constant 0 : index
    %22 = vector.load %arg8[%c0_16, %c0_17] : memref<8x128xf32, #tpu.memory_space<vmem>>, vector<8x128xf32>
    tpu.vector_store %arg8[%c0_16, %c0_17], %21 {strides = array<i32>} : memref<8x128xf32, #tpu.memory_space<vmem>>, vector<8x128xf32>,
    %c0_i32_18 = arith.constant 0 : i32
    %23 = arith.cmpi eq, %arg1, %c0_i32_18 : i32
    %24 = arith.extui %23 : i1 to i32
    %c0_i32_19 = arith.constant 0 : i32
    %25 = arith.cmpi ne, %24, %c0_i32_19 : i32
    scf.if %25 {
      %c0_20 = arith.constant 0 : index
      %c0_21 = arith.constant 0 : index
      %26 = vector.load %arg7[%c0_20, %c0_21] : memref<8x128xf32, #tpu.memory_space<vmem>>, vector<8x128xf32>
      %27 = vector.shape_cast %26 : vector<8x128xf32> to vector<1x8x128xf32>
      %cst_22 = arith.constant dense<0.000000e+00> : vector<1xf32>
      %28 = vector.multi_reduction <add>, %27, %cst_22 [1, 2] : vector<1x8x128xf32> to vector<1xf32>
      %29 = vector.shape_cast %28 : vector<1xf32> to vector<1x1x1xf32>
      %30 = vector.extract %29[0, 0, 0] : f32 from vector<1x1x1xf32>
      %c0_23 = arith.constant 0 : index
      %c0_24 = arith.constant 0 : index
      %31 = vector.load %arg8[%c0_23, %c0_24] : memref<8x128xf32, #tpu.memory_space<vmem>>, vector<8x128xf32>
      %32 = vector.shape_cast %31 : vector<8x128xf32> to vector<1x8x128xf32>
      %cst_25 = arith.constant dense<0.000000e+00> : vector<1xf32>
      %33 = vector.multi_reduction <add>, %32, %cst_25 [1, 2] : vector<1x8x128xf32> to vector<1xf32>
      %34 = vector.shape_cast %33 : vector<1xf32> to vector<1x1x1xf32>
      %35 = vector.extract %34[0, 0, 0] : f32 from vector<1x1x1xf32>
      %36 = tpu.iota {dimensions = array<i32: 0>} : vector<8x128xi32>
      %37 = tpu.iota {dimensions = array<i32: 1>} : vector<8x128xi32>
      %c0_i32_26 = arith.constant 0 : i32
      %38 = vector.broadcast %c0_i32_26 : i32 to vector<8x128xi32>
      %39 = arith.cmpi eq, %36, %38 : vector<8x128xi32>
      %c0_i32_27 = arith.constant 0 : i32
      %40 = vector.broadcast %c0_i32_27 : i32 to vector<8x128xi32>
      %41 = arith.cmpi eq, %37, %40 : vector<8x128xi32>
      %42 = arith.andi %39, %41 : vector<8x128xi1>
      %cst_28 = arith.constant 0.000000e+00 : f32
      %43 = vector.broadcast %30 : f32 to vector<8x128xf32>
      %44 = vector.broadcast %cst_28 : f32 to vector<8x128xf32>
      %45 = arith.select %42, %43, %44 : vector<8x128xi1>, vector<8x128xf32>
      %c1_i32 = arith.constant 1 : i32
      %46 = vector.broadcast %c1_i32 : i32 to vector<8x128xi32>
      %47 = arith.cmpi eq, %37, %46 : vector<8x128xi32>
      %48 = arith.andi %39, %47 : vector<8x128xi1>
      %cst_29 = arith.constant 0.000000e+00 : f32
      %49 = vector.broadcast %35 : f32 to vector<8x128xf32>
      %50 = vector.broadcast %cst_29 : f32 to vector<8x128xf32>
      %51 = arith.select %48, %49, %50 : vector<8x128xi1>, vector<8x128xf32>
      %52 = arith.addf %45, %51 : vector<8x128xf32>
      %c0_30 = arith.constant 0 : index
      %c0_31 = arith.constant 0 : index
      %53 = vector.load %arg6[%c0_30, %c0_31] : memref<8x128xf32, #tpu.memory_space<vmem>>, vector<8x128xf32>
      tpu.vector_store %arg6[%c0_30, %c0_31], %52 {strides = array<i32>} : memref<8x128xf32, #tpu.memory_space<vmem>>, vector<8x128xf32>,
    } else {
    }
    return
  }
  func.func @transform_0(%arg0: i32, %arg1: i32) -> (i32, i32) {
    %c1_i32 = arith.constant 1 : i32
    %0 = arith.muli %arg0, %c1_i32 : i32
    %1 = arith.addi %0, %arg1 : i32
    %c0_i32 = arith.constant 0 : i32
    %c0_i32_0 = arith.constant 0 : i32
    return %1, %c0_i32 : i32, i32
  }
  func.func @transform_1(%arg0: i32, %arg1: i32) -> (i32, i32) {
    %c1_i32 = arith.constant 1 : i32
    %0 = arith.muli %arg0, %c1_i32 : i32
    %1 = arith.addi %0, %arg1 : i32
    %c0_i32 = arith.constant 0 : i32
    %c0_i32_0 = arith.constant 0 : i32
    return %1, %c0_i32 : i32, i32
  }
  func.func @transform_2(%arg0: i32, %arg1: i32) -> (i32, i32) {
    %c1_i32 = arith.constant 1 : i32
    %0 = arith.muli %arg0, %c1_i32 : i32
    %1 = arith.addi %0, %arg1 : i32
    %c0_i32 = arith.constant 0 : i32
    %c0_i32_0 = arith.constant 0 : i32
    return %1, %c0_i32 : i32, i32
  }
  func.func @transform_3(%arg0: i32, %arg1: i32) -> (i32, i32) {
    %c1_i32 = arith.constant 1 : i32
    %0 = arith.muli %arg0, %c1_i32 : i32
    %1 = arith.addi %0, %arg1 : i32
    %c0_i32 = arith.constant 0 : i32
    %c0_i32_0 = arith.constant 0 : i32
    return %1, %c0_i32 : i32, i32
  }
  func.func @transform_4(%arg0: i32, %arg1: i32) -> (i32, i32) {
    %c0_i32 = arith.constant 0 : i32
    %c0_i32_0 = arith.constant 0 : i32
    return %arg0, %c0_i32 : i32, i32
  }
}

</mosaic_0001>

<llo_original>
// kernel: tpu_custom_call.1
$region0: #{tpu_custom_call.1}
  #allocation0 [shape = 'u32[]', space=smem, size = 0x4, offset = 0x4, fixed_abs, tag = 'smem constant byte address 0x4 - core index']
  #allocation1 [shape = 'u32[144,128]{1,0:T(1,128)}', space=vmem, size = 0x12000, scoped, tag = 'internal scratch']
  #allocation2 [shape = 'f32[8,128]{1,0:T(8,128)}', space=vmem, size = 0x1000, scoped, tag = 'scratch operand']
  #allocation3 [shape = 'f32[8,128]{1,0:T(8,128)}', space=vmem, size = 0x1000, scoped, tag = 'scratch operand']
  %s0 = inlined_call_operand.hbm [shape: f32[8,128], index: 0, kind: input, shape index: {}]
  %s1 = inlined_call_operand.hbm [shape: f32[8,128], index: 1, kind: input, shape index: {}]
  %s2 = inlined_call_operand.hbm [shape: f32[8,128], index: 2, kind: input, shape index: {}]
  %s3 = inlined_call_operand.vmem [shape: f32[8,128], index: 3, kind: input, shape index: {}]
  %s4 = inlined_call_operand.hbm [shape: f32[8,128], index: 4, kind: output, shape index: {}]
  %s5 = sld [smem:[#allocation0]]
  $region46: #{tpu_custom_call.1} parent=0
    _
  %s7 = ssub.s32 1, %s5
  %s8 = scalar_select 0, %s7, %s5
  $region1: #{tpu_custom_call.1} parent=0
    #allocation4 [shape = 'u8[4096]{0}', space=vmem, size = 0x1000, scoped, tag = 'input window, operand 0, single buffered']
    #allocation5 [shape = 's32[1]{0}', space=sflag, size = 0x4, scoped, tag = 'scoped memory for tpu_custom_call.1']
    #allocation6 [shape = 's32[1]{0}', space=sflag, size = 0x4, scoped, tag = 'scoped memory for tpu_custom_call.1']
    #allocation7 [shape = 'u8[4096]{0}', space=vmem, size = 0x1000, scoped, tag = 'input window, operand 1, single buffered']
    #allocation8 [shape = 's32[1]{0}', space=sflag, size = 0x4, scoped, tag = 'scoped memory for tpu_custom_call.1']
    #allocation9 [shape = 'u8[4096]{0}', space=vmem, size = 0x1000, scoped, tag = 'input window, operand 2, single buffered']
    #allocation10 [shape = 'u8[4096]{0}', space=vmem, size = 0x1000, scoped, tag = 'output window, operand 0, single buffered']
    %9 = vsyncpa [#allocation5], 0
    %10 = vsyncpa [#allocation8], 0
    %11 = vsyncpa [#allocation6], 0
    // Predicated region
    $region2: #{tpu_custom_call.1} parent=1 // pred_check
      _
    $region3: #{tpu_custom_call.1} parent=1 // pred_check_branch
      %13 = sbr.rel (0) target = $region5
    $region4: #{tpu_custom_call.1} parent=1 // pred_region
      %s14 = sadd.s32 0, 0
      %s16 = ssub.s32 128, 128
      %17 = vsyncadd [#allocation5], %s16
      %s18 = smul.addr %s14, 128
      %s19 = scalar_lea.hbm %s0, %s18
      %s21 = sshll.u32 [#allocation4], 4
      %s22 = int_to_ptr.vmem [resolvable:$true] %s21
      %24 = dma.hbm_to_vmem [thread:$0]  %s19, 128, %s22, [#allocation5]
    $region5: #{tpu_custom_call.1} parent=1 // pred_fallthru
      _
    // Predicated region
    $region6: #{tpu_custom_call.1} parent=1 // pred_check
      _
    $region7: #{tpu_custom_call.1} parent=1 // pred_check_branch
      %26 = sbr.rel (0) target = $region9
    $region8: #{tpu_custom_call.1} parent=1 // pred_region
      %s27 = sadd.s32 0, 0
      %s29 = ssub.s32 128, 128
      %30 = vsyncadd [#allocation8], %s29
      %s31 = smul.addr %s27, 128
      %s32 = scalar_lea.hbm %s1, %s31
      %s34 = sshll.u32 [#allocation7], 4
      %s35 = int_to_ptr.vmem [resolvable:$true] %s34
      %37 = dma.hbm_to_vmem [thread:$0]  %s32, 128, %s35, [#allocation8]
    $region9: #{tpu_custom_call.1} parent=1 // pred_fallthru
      _
    // Predicated region
    $region10: #{tpu_custom_call.1} parent=1 // pred_check
      _
    $region11: #{tpu_custom_call.1} parent=1 // pred_check_branch
      %39 = sbr.rel (0) target = $region13
    $region12: #{tpu_custom_call.1} parent=1 // pred_region
      %s40 = sadd.s32 0, 0
      %s42 = ssub.s32 128, 128
      %43 = vsyncadd [#allocation8], %s42
      %s44 = smul.addr %s40, 128
      %s45 = scalar_lea.hbm %s2, %s44
      %s47 = sshll.u32 [#allocation9], 4
      %s48 = int_to_ptr.vmem [resolvable:$true] %s47
      %50 = dma.hbm_to_vmem [thread:$0]  %s45, 128, %s48, [#allocation8]
    $region13: #{tpu_custom_call.1} parent=1 // pred_fallthru
      _
    // Predicated region
    $region14: #{tpu_custom_call.1} parent=1 // pred_check
      _
    $region15: #{tpu_custom_call.1} parent=1 // pred_check_branch
      %52 = sbr.rel (0) target = $region17
    $region16: #{tpu_custom_call.1} parent=1 // pred_region
      %s53 = sadd.s32 0, 0
      %p54 = scmp.lt.s32.totalorder %s53, 0
      %s55 = scalar_select %p54, %s53, 0
      %s56 = smul.addr %s55, 8
      %s57 = scalar_lea.vmem %s3, %s56
      %s58 = sadd.s32 0, 0
    $region17: #{tpu_custom_call.1} parent=1 // pred_fallthru
      _
    // Predicated region
    $region18: #{tpu_custom_call.1} parent=1 // pred_check
      _
    $region19: #{tpu_custom_call.1} parent=1 // pred_check_branch
      %60 = sbr.rel (0) target = $region21
    $region20: #{tpu_custom_call.1} parent=1 // pred_region
      %61 = dma.done [#allocation5], 128
    $region21: #{tpu_custom_call.1} parent=1 // pred_fallthru
      _
    // Predicated region
    $region22: #{tpu_custom_call.1} parent=1 // pred_check
      _
    $region23: #{tpu_custom_call.1} parent=1 // pred_check_branch
      %63 = sbr.rel (0) target = $region25
    $region24: #{tpu_custom_call.1} parent=1 // pred_region
      %64 = dma.done [#allocation8], 128
    $region25: #{tpu_custom_call.1} parent=1 // pred_fallthru
      _
    // Predicated region
    $region26: #{tpu_custom_call.1} parent=1 // pred_check
      _
    $region27: #{tpu_custom_call.1} parent=1 // pred_check_branch
      %66 = sbr.rel (0) target = $region29
    $region28: #{tpu_custom_call.1} parent=1 // pred_region
      %67 = dma.done [#allocation8], 128
    $region29: #{tpu_custom_call.1} parent=1 // pred_fallthru
      _
    %s68 = sadd.s32 0, 0
    %p69 = scmp.lt.s32.totalorder %s68, 0
    %s70 = scalar_select %p69, %s68, 0
    %s71 = smul.addr %s70, 8
    %s72 = scalar_lea.vmem %s3, %s71
    %s73 = sadd.s32 0, 0
    %s74 = sadd.s32 0, 0
    %s75 = sadd.s32 0, 0
    %s76 = sadd.s32 0, 0
    %p77 = scmp.lt.s32.totalorder %s76, 0
    %s78 = scalar_select %p77, %s76, 0
    %s79 = smul.addr %s78, 8
    %s80 = scalar_lea.vmem %s3, %s79
    %s81 = sadd.s32 0, 0
    %p82 = scmp.eq.s32.totalorder 0, 0
    // Predicated region
    $region30: #{tpu_custom_call.1} parent=1 // pred_check
      %p83 = pneg %p82
    $region31: #{tpu_custom_call.1} parent=1 // pred_check_branch
      %85 = sbr.rel (%p83) target = $region33
    $region32: #{tpu_custom_call.1} parent=1 // pred_region
      %86 = vst [vmem:[#allocation2] sm:$0xff] 0.0
      %87 = vst [vmem:[#allocation3] sm:$0xff] 0.0
    $region33: #{tpu_custom_call.1} parent=1 // pred_fallthru
      _
    %v88 = vld [vmem:[#allocation4] sm:$0xff]
    %v89 = vld [vmem:[#allocation7] sm:$0xff]
    %v90 = vld [vmem:[#allocation9] sm:$0xff]
    %v91 = vld [vmem:[%s80] sm:$0xff]
    %v92 = vmul.f32 %v91, 4.7287363e-06
    %v93 = vsub.f32 %v88, %v89
    %v94 = vsub.f32 %v90, %v92
    %v95 = vmul.f32 %v93, %v93
    %v96 = vmul.f32 %v94, %v94
    %v97 = vld [vmem:[#allocation2] sm:$0xff]
    %v98 = vadd.f32 %v95, 0.0
    %v99 = vadd.f32 %v97, %v98
    %100 = vst [vmem:[#allocation2] sm:$0xff] %v99
    %v101 = vld [vmem:[#allocation3] sm:$0xff]
    %v102 = vadd.f32 %v96, 0.0
    %v103 = vadd.f32 %v101, %v102
    %104 = vst [vmem:[#allocation3] sm:$0xff] %v103
    // Predicated region
    $region34: #{tpu_custom_call.1} parent=1 // pred_check
      %p105 = pneg %p82
    $region35: #{tpu_custom_call.1} parent=1 // pred_check_branch
      %107 = sbr.rel (%p105) target = $region37
    $region36: #{tpu_custom_call.1} parent=1 // pred_region
      %v108 = vld [vmem:[#allocation2] sm:$0xff]
      %109 = vadd.xlane.f32.xlu0 %v108
      %v110 = vpop.xlane.xlu0 %109
      %v111 = vrot.slane %v110, 4
      %v112 = vadd.f32 %v110, %v111
      %v113 = vrot.slane %v112, 2
      %v114 = vadd.f32 %v112, %v113
      %v115 = vrot.slane %v114, 1
      %v116 = vadd.f32 %v114, %v115
      %s117 = vtos %v116
      %v118 = vld [vmem:[#allocation3] sm:$0xff]
      %119 = vadd.xlane.f32.xlu0 %v118
      %v120 = vpop.xlane.xlu0 %119
      %v121 = vrot.slane %v120, 4
      %v122 = vadd.f32 %v120, %v121
      %v123 = vrot.slane %v122, 2
      %v124 = vadd.f32 %v122, %v123
      %v125 = vrot.slane %v124, 1
      %v126 = vadd.f32 %v124, %v125
      %s127 = vtos %v126
      %v128 = vlaneseq
      %v129 = vshrl.u32 %v128, 7
      %v130 = vlaneseq
      %v131 = vand.u32 %v130, 127
      %vm132 = vcmp.eq.s32.totalorder %v129, 0
      %vm133 = vcmp.eq.s32.totalorder %v131, 0
      %vm134 = vmand %vm132, %vm133
      %v135 = vstv %s117
      %v136 = vsel %vm134, %v135, 0.0
      %vm137 = vcmp.eq.s32.totalorder %v131, 1
      %vm138 = vmand %vm132, %vm137
      %v139 = vstv %s127
      %v140 = vsel %vm138, %v139, 0.0
      %v141 = vadd.f32 %v136, %v140
      %142 = vst [vmem:[#allocation10] sm:$0xff] %v141
    $region37: #{tpu_custom_call.1} parent=1 // pred_fallthru
      _
    // Predicated region
    $region38: #{tpu_custom_call.1} parent=1 // pred_check
      _
    $region39: #{tpu_custom_call.1} parent=1 // pred_check_branch
      %144 = sbr.rel (0) target = $region41
    $region40: #{tpu_custom_call.1} parent=1 // pred_region
      %s146 = ssub.s32 128, 128
      %147 = vsyncadd [#allocation6], %s146
      %s149 = sshll.u32 [#allocation10], 4
      %s150 = int_to_ptr.vmem [resolvable:$true] %s149
      %152 = dma.vmem_to_hbm [thread:$0]  %s150, 128, %s4, [#allocation6]
    $region41: #{tpu_custom_call.1} parent=1 // pred_fallthru
      _
    // Predicated region
    $region42: #{tpu_custom_call.1} parent=1 // pred_check
      _
    $region43: #{tpu_custom_call.1} parent=1 // pred_check_branch
      %154 = sbr.rel (0) target = $region45
    $region44: #{tpu_custom_call.1} parent=1 // pred_region
      %155 = dma.done [#allocation6], 128
    $region45: #{tpu_custom_call.1} parent=1 // pred_fallthru
      _
    %156 = vsyncpa [#allocation5], 1
    %157 = vsyncpa [#allocation8], 1
    %158 = vsyncpa [#allocation6], 1

</llo_original>
